<compile_context>
chip_gen: v7x
topology: tpu7x:2x2x1
jax: 0.10.0
libtpu: 0.0.40
codegen_flags: <defaults>
</compile_context>

<pallas_src>
import functools

import jax
import jax.numpy as jnp
from jax.experimental import pallas as pl
from jax.experimental.pallas import tpu as pltpu

_LANE = 128
_SUBLANE = 8


def _round_up(x, m):
    return ((x + m - 1) // m) * m


def _cdiv(a, b):
    return (a + b - 1) // b


# ----------------------------- kernels --------------------------------------


def _dot_tiles(x_ref, w_ref, compute_dtype):
    x = x_ref[...]
    w = w_ref[...]
    if compute_dtype is not None:
        # In-kernel cast: no standalone XLA cast pass over x in HBM.
        x = x.astype(compute_dtype)
        w = w.astype(compute_dtype)
    # w is pre-transposed to [K, N] in the wrapper -> MXU-native contraction,
    # no per-step XLU transpose of the weight tile.
    return jnp.dot(x, w, preferred_element_type=jnp.float32)


def _kernel_1k(x_ref, w_ref, o_ref, *, compute_dtype):
    # Whole contraction fits one K tile: direct store, no scratch, no pl.when.
    o_ref[...] = _dot_tiles(x_ref, w_ref, compute_dtype).astype(o_ref.dtype)


def _kernel_multik_f32out(x_ref, w_ref, o_ref, *, compute_dtype):
    # f32 output: the output block is resident across the K axis, so
    # accumulate directly into it (saves tm*tn*4 B VMEM + a per-block copy).
    @pl.when(pl.program_id(2) == 0)
    def _():
        o_ref[...] = jnp.zeros_like(o_ref)

    o_ref[...] += _dot_tiles(x_ref, w_ref, compute_dtype)


def _kernel_multik_acc(x_ref, w_ref, o_ref, acc_ref, *, compute_dtype):
    # Narrow output dtype: accumulate in f32 scratch, cast on the last K step.
    @pl.when(pl.program_id(2) == 0)
    def _():
        acc_ref[...] = jnp.zeros_like(acc_ref)

    acc_ref[...] += _dot_tiles(x_ref, w_ref, compute_dtype)

    @pl.when(pl.program_id(2) == pl.num_programs(2) - 1)
    def _():
        o_ref[...] = acc_ref[...].astype(o_ref.dtype)


# ----------------------------- pallas_call wrapper ---------------------------


def _linear_pallas(x_flat, w_t, out_dtype, compute_dtype, *, tm, tn, tk, vmem_cap):
    """y[M, N] = x_flat[M, K] @ w_t[K, N]  (w_t already transposed)."""
    M, K = x_flat.shape
    K2, N = w_t.shape
    assert K == K2
    # Pallas does NOT zero-fill out-of-bounds input regions of a ragged K
    # block; the wrapper zero-pads K so the contraction axis tiles exactly.
    assert K % tk == 0, (K, tk)
    # NOTE: a ragged last M block is safe only because the contraction is
    # row-independent: garbage x rows produce garbage output rows that Pallas
    # discards on writeback. Do not add cross-row reductions to this kernel.

    n_m = _cdiv(M, tm)
    n_n = _cdiv(N, tn)
    n_k = K // tk

    x_bytes = jnp.dtype(x_flat.dtype).itemsize
    w_bytes = jnp.dtype(w_t.dtype).itemsize
    o_bytes = jnp.dtype(out_dtype).itemsize
    out_is_f32 = jnp.dtype(out_dtype) == jnp.dtype(jnp.float32)

    vmem_need = (
        2 * tm * tk * x_bytes
        + 2 * tk * tn * w_bytes
        + 2 * tm * tn * o_bytes
        + (0 if (n_k == 1 or out_is_f32) else tm * tn * 4)
    )
    vmem_limit = int(min(max(2 * vmem_need + (4 << 20), 16 << 20), vmem_cap))

    cost = pl.CostEstimate(
        flops=2 * M * K * N,
        transcendentals=0,
        bytes_accessed=M * K * x_bytes + K * N * w_bytes + M * N * o_bytes,
    )

    if n_k == 1:
        kernel = functools.partial(_kernel_1k, compute_dtype=compute_dtype)
        grid_spec = pltpu.PrefetchScalarGridSpec(
            num_scalar_prefetch=0,
            grid=(n_m, n_n),
            in_specs=[
                pl.BlockSpec((tm, tk), lambda i, j: (i, 0)),
                pl.BlockSpec((tk, tn), lambda i, j: (0, j)),
            ],
            out_specs=pl.BlockSpec((tm, tn), lambda i, j: (i, j)),
        )
        dims = ("parallel", "parallel")
    else:
        if out_is_f32:
            kernel = functools.partial(_kernel_multik_f32out, compute_dtype=compute_dtype)
            scratch = []
        else:
            kernel = functools.partial(_kernel_multik_acc, compute_dtype=compute_dtype)
            scratch = [pltpu.VMEM((tm, tn), jnp.float32)]
        grid_spec = pltpu.PrefetchScalarGridSpec(
            num_scalar_prefetch=0,
            grid=(n_m, n_n, n_k),
            in_specs=[
                pl.BlockSpec((tm, tk), lambda i, j, k: (i, k)),
                pl.BlockSpec((tk, tn), lambda i, j, k: (k, j)),
            ],
            out_specs=pl.BlockSpec((tm, tn), lambda i, j, k: (i, j)),
            scratch_shapes=scratch,
        )
        dims = ("parallel", "parallel", "arbitrary")

    return pl.pallas_call(
        kernel,
        out_shape=jax.ShapeDtypeStruct((M, N), out_dtype),
        grid_spec=grid_spec,
        compiler_params=pltpu.CompilerParams(
            dimension_semantics=dims,
            vmem_limit_bytes=vmem_limit,
        ),
        cost_estimate=cost,
    )(x_flat, w_t)


# ----------------------------- tiling heuristics ----------------------------


def _device_caps():
    """(physical VMEM bytes, lowercase device_kind). Safe fallbacks."""
    vmem = None
    kind = ""
    try:
        info = pltpu.get_tpu_info()
        vmem = getattr(info, "vmem_capacity_bytes", None)
    except Exception:
        vmem = None
    try:
        kind = jax.devices()[0].device_kind.lower()
    except Exception:
        kind = ""
    if vmem is None or int(vmem) <= 0:
        vmem = 64 << 20  # conservative: v7x per-TensorCore VMEM
    return int(vmem), kind


def _pick_tk(K):
    """Return (tk, padded_K): tk exactly tiles padded_K and stays VMEM-sized."""
    if K <= 2048:
        return K, K  # whole contraction in one tile (block dim == full dim)
    for cand in (2048, 1024, 512):
        if K % cand == 0:
            return cand, K
    # Ragged large K: split with a 128-multiple tile; the wrapper zero-pads the
    # contraction axis (zeros, never Pallas block garbage).
    tk = 512
    return tk, _round_up(K, tk)


# ----------------------------- public forward -------------------------------


def normal_embedding_forward(x, weight, *, compute_dtype=None, out_dtype=None):
    """NormalEmbedding forward: y = x @ weight.T (nn.Linear, bias=False).

    weight: [emb_dim, input_dim] (N(0,1)-initialized by the module).
    compute_dtype: optional MXU input dtype (cast in-kernel; f32 accumulation).
    out_dtype: output dtype; defaults to compute_dtype when given (so the
      dominant M*N output stream is actually narrowed), else x.dtype.
    """
    emb_dim, input_dim = weight.shape
    assert x.shape[-1] == input_dim
    lead = x.shape[:-1]

    if out_dtype is None:
        out_dtype = compute_dtype if compute_dtype is not None else x.dtype

    x_flat = x.reshape(-1, input_dim)
    M = x_flat.shape[0]

    # One-time weight transpose to [K, N]: MXU-native contraction in-kernel
    # (no per-step XLU transpose). The optional compute-dtype cast fuses into
    # the same XLA pass over the (small) weight.
    w_t = weight.T
    if compute_dtype is not None and w_t.dtype != jnp.dtype(compute_dtype):
        w_t = w_t.astype(compute_dtype)

    # --- contraction (K) tiling: exact tiling, zero-pad K if needed ---
    tk, k_pad = _pick_tk(input_dim)
    if k_pad != input_dim:
        x_flat = jnp.pad(x_flat, ((0, 0), (0, k_pad - input_dim)))
        w_t = jnp.pad(w_t, ((0, k_pad - input_dim), (0, 0)))

    vmem_phys, kind = _device_caps()
    is_small_vmem = vmem_phys <= (64 << 20)  # v7x-like (64 MiB per TC)
    # Generation-aware scoped-VMEM ceiling (headroom for compiler scratch):
    # ~48 MiB on 64-MiB chips, ~100 MiB on 128-MiB chips.
    vmem_cap = min(max(vmem_phys - (16 << 20), 32 << 20), 100 << 20)

    # --- output (N) tiling: no pad / no post-kernel slice ---
    tn_cap = 1024 if is_small_vmem else 2048
    n_slice = None
    if emb_dim % _LANE == 0:
        tn = min(emb_dim, tn_cap)
    elif emb_dim <= 2048:
        # Full-dim N block is legal; only the trailing lane group gets masked
        # stores, which beats an extra full HBM pass to slice padded columns.
        tn = emb_dim
    else:
        # Rare: huge ragged emb_dim. Pad W columns once (zero columns) and
        # slice the padding off afterwards.
        n_padded = _round_up(emb_dim, _LANE)
        w_t = jnp.pad(w_t, ((0, 0), (0, n_padded - emb_dim)))
        tn = min(n_padded, tn_cap)
        n_slice = emb_dim

    # --- M tiling: memory-bound, large tiles amortize ~0.35 us/grid-step ---
    if "v5" in kind:
        tm_cap = 512          # v5e: ~0.82 TB/s HBM already amortized at 512
    elif is_small_vmem:
        tm_cap = 2048         # v7x: 3.2 TB/s needs bigger tiles per step
    else:
        tm_cap = 1024         # v6e
    m_align = 16 if jnp.dtype(out_dtype) == jnp.dtype(jnp.bfloat16) else _SUBLANE
    tm = min(tm_cap, _round_up(M, m_align))

    # v7x has 2 TensorCores: if the grid collapsed to a single block but there
    # is enough work, split M so both cores get a share (tiles stay >= 256).
    N_total = w_t.shape[1]
    if is_small_vmem and _cdiv(M, tm) * _cdiv(N_total, tn) == 1 and M >= 512:
        tm = max(256, _round_up(_cdiv(M, 2), m_align))

    y_flat = _linear_pallas(
        x_flat, w_t, out_dtype, compute_dtype,
        tm=tm, tn=tn, tk=tk, vmem_cap=vmem_cap)
    if n_slice is not None:
        y_flat = y_flat[:, :n_slice]
    return y_flat.reshape(*lead, y_flat.shape[-1])


if __name__ == "__main__":
    input_dim = 32
    emb_dim = 64
    batch, seq = 2, 8

    key = jax.random.PRNGKey(0)
    kx, kw, kw2 = jax.random.split(key, 3)

    x = jax.random.normal(kx, (batch, seq, input_dim), dtype=jnp.float32)
    # nn.init.normal_(weight, 0.0, 1.0): standard normal, [emb_dim, input_dim]
    weight = jax.random.normal(kw, (emb_dim, input_dim), dtype=jnp.float32)

    # Exact (f32) path — matches PyTorch's f32 Linear semantics.
    y = jax.block_until_ready(normal_embedding_forward(x, weight))
    y_ref = jnp.einsum("bsi,ei->bse", x, weight)
    assert y.shape == (batch, seq, emb_dim)
    assert y.dtype == jnp.float32
    assert jnp.allclose(y, y_ref, atol=1e-5, rtol=1e-5)

    # bf16 streaming path: MXU inputs cast in-kernel, bf16 output halves the
    # dominant M*N HBM stream; f32 accumulation on the MXU.
    y_bf16 = jax.block_until_ready(
        normal_embedding_forward(x, weight, compute_dtype=jnp.bfloat16))
    assert y_bf16.dtype == jnp.bfloat16
    assert jnp.allclose(y_bf16.astype(jnp.float32), y_ref, atol=1.5e-1, rtol=5e-2)

    # Tiled-M path: M not a multiple of tm exercises the ragged last M block.
    x_big = jax.random.normal(kx, (3, 700, input_dim), dtype=jnp.float32)
    y_big = jax.block_until_ready(normal_embedding_forward(x_big, weight))
    y_big_ref = jnp.einsum("bsi,ei->bse", x_big, weight)
    assert jnp.allclose(y_big, y_big_ref, atol=1e-4, rtol=1e-4)

    # emb_dim > 128 but not a multiple of 128: full-dim N block, no pad/slice.
    emb_dim2 = 200
    weight2 = jax.random.normal(kw2, (emb_dim2, input_dim), dtype=jnp.float32)
    y2 = jax.block_until_ready(normal_embedding_forward(x, weight2))
    y2_ref = jnp.einsum("bsi,ei->bse", x, weight2)
    assert y2.shape == (batch, seq, emb_dim2)
    assert jnp.allclose(y2, y2_ref, atol=1e-4, rtol=1e-4)

    print("KERNEL_OK")
</pallas_src>

<mosaic_0001>
module attributes {stable_mosaic.version = 11 : i64} {
  func.func @_kernel_1k(%arg0: i32, %arg1: i32, %arg2: memref<16x32xf32, #tpu.memory_space<vmem>>, %arg3: memref<32x64xf32, #tpu.memory_space<vmem>>, %arg4: memref<16x64xf32, #tpu.memory_space<vmem>>) attributes {dimension_semantics = [#tpu.dimension_semantics<parallel>, #tpu.dimension_semantics<parallel>], iteration_bounds = array<i64: 1, 1>, scalar_prefetch = 0 : i64, scratch_operands = 0 : i64, tpu.core_type = #tpu.core_type<tc>, window_params = [{transform_indices = @transform_0, window_bounds = array<i64: 16, 32>}, {transform_indices = @transform_1, window_bounds = array<i64: 32, 64>}, {transform_indices = @transform_2, window_bounds = array<i64: 16, 64>}]} {
    %c0 = arith.constant 0 : index
    %c0_0 = arith.constant 0 : index
    %0 = vector.load %arg2[%c0, %c0_0] : memref<16x32xf32, #tpu.memory_space<vmem>>, vector<16x32xf32>
    %c0_1 = arith.constant 0 : index
    %c0_2 = arith.constant 0 : index
    %1 = vector.load %arg3[%c0_1, %c0_2] : memref<32x64xf32, #tpu.memory_space<vmem>>, vector<32x64xf32>
    %cst = arith.constant dense<0.000000e+00> : vector<16x64xf32>
    %2 = tpu.matmul %0, %1, %cst {dimension_numbers = #tpu.dot_dimension_numbers<[1], [0], [0], [1], [0, 0, 1, 1], [], []>} : vector<16x32xf32>, vector<32x64xf32>, vector<16x64xf32> -> vector<16x64xf32>
    %c0_3 = arith.constant 0 : index
    %c0_4 = arith.constant 0 : index
    %3 = vector.load %arg4[%c0_3, %c0_4] : memref<16x64xf32, #tpu.memory_space<vmem>>, vector<16x64xf32>
    tpu.vector_store %arg4[%c0_3, %c0_4], %2 {strides = array<i32>} : memref<16x64xf32, #tpu.memory_space<vmem>>, vector<16x64xf32>,
    return
  }
  func.func @transform_0(%arg0: i32, %arg1: i32) -> (i32, i32) {
    %c0_i32 = arith.constant 0 : i32
    %c0_i32_0 = arith.constant 0 : i32
    return %arg0, %c0_i32 : i32, i32
  }
  func.func @transform_1(%arg0: i32, %arg1: i32) -> (i32, i32) {
    %c0_i32 = arith.constant 0 : i32
    %c0_i32_0 = arith.constant 0 : i32
    return %c0_i32, %arg1 : i32, i32
  }
  func.func @transform_2(%arg0: i32, %arg1: i32) -> (i32, i32) {
    %c0_i32 = arith.constant 0 : i32
    return %arg0, %arg1 : i32, i32
  }
}

</mosaic_0001>

<llo_original>
// kernel: tpu_custom_call.1
$region0: #{tpu_custom_call.1}
  #allocation0 [shape = 'u32[]', space=smem, size = 0x4, offset = 0x4, fixed_abs, tag = 'smem constant byte address 0x4 - core index']
  #allocation1 [shape = 'u32[144,128]{1,0:T(1,128)}', space=vmem, size = 0x12000, scoped, tag = 'internal scratch']
  %s0 = inlined_call_operand.hbm [shape: f32[16,32], index: 0, kind: input, shape index: {}]
  %s1 = inlined_call_operand.hbm [shape: f32[32,64], index: 1, kind: input, shape index: {}]
  %s2 = inlined_call_operand.hbm [shape: f32[16,64], index: 2, kind: output, shape index: {}]
  %s3 = sld [smem:[#allocation0]]
  $region26: #{tpu_custom_call.1} parent=0
    _
  %s5 = ssub.s32 1, %s3
  %s6 = scalar_select 0, %s5, %s3
  $region1: #{tpu_custom_call.1} parent=0
    #allocation2 [shape = 'u8[8192]{0}', space=vmem, size = 0x2000, scoped, tag = 'input window, operand 0, single buffered']
    #allocation3 [shape = 's32[1]{0}', space=sflag, size = 0x4, scoped, tag = 'scoped memory for tpu_custom_call.1']
    #allocation4 [shape = 's32[1]{0}', space=sflag, size = 0x4, scoped, tag = 'scoped memory for tpu_custom_call.1']
    #allocation5 [shape = 'u8[16384]{0}', space=vmem, size = 0x4000, scoped, tag = 'input window, operand 1, single buffered']
    #allocation6 [shape = 's32[1]{0}', space=sflag, size = 0x4, scoped, tag = 'scoped memory for tpu_custom_call.1']
    #allocation7 [shape = 'u8[8192]{0}', space=vmem, size = 0x2000, scoped, tag = 'output window, operand 0, single buffered']
    %7 = vsyncpa [#allocation3], 0
    %8 = vsyncpa [#allocation6], 0
    %9 = vsyncpa [#allocation4], 0
    // Predicated region
    $region2: #{tpu_custom_call.1} parent=1 // pred_check
      _
    $region3: #{tpu_custom_call.1} parent=1 // pred_check_branch
      %11 = sbr.rel (0) target = $region5
    $region4: #{tpu_custom_call.1} parent=1 // pred_region
      %s13 = ssub.s32 256, 256
      %14 = vsyncadd [#allocation3], %s13
      %s15 = sshll.u32 [#allocation2], 4
      %s16 = int_to_ptr.vmem [resolvable:$true] %s15
      %21 = dma.hbm_to_vmem [thread:$0]  %s0, 256, %s16, [#allocation3], 128, 128, 8
    $region5: #{tpu_custom_call.1} parent=1 // pred_fallthru
      _
    // Predicated region
    $region6: #{tpu_custom_call.1} parent=1 // pred_check
      _
    $region7: #{tpu_custom_call.1} parent=1 // pred_check_branch
      %23 = sbr.rel (0) target = $region9
    $region8: #{tpu_custom_call.1} parent=1 // pred_region
      %s25 = ssub.s32 512, 512
      %26 = vsyncadd [#allocation6], %s25
      %s27 = sshll.u32 [#allocation5], 4
      %s28 = int_to_ptr.vmem [resolvable:$true] %s27
      %33 = dma.hbm_to_vmem [thread:$0]  %s1, 512, %s28, [#allocation6], 128, 128, 8
    $region9: #{tpu_custom_call.1} parent=1 // pred_fallthru
      _
    // Predicated region
    $region10: #{tpu_custom_call.1} parent=1 // pred_check
      _
    $region11: #{tpu_custom_call.1} parent=1 // pred_check_branch
      %35 = sbr.rel (0) target = $region13
    $region12: #{tpu_custom_call.1} parent=1 // pred_region
      %36 = dma.done [#allocation3], 256
    $region13: #{tpu_custom_call.1} parent=1 // pred_fallthru
      _
    // Predicated region
    $region14: #{tpu_custom_call.1} parent=1 // pred_check
      _
    $region15: #{tpu_custom_call.1} parent=1 // pred_check_branch
      %38 = sbr.rel (0) target = $region17
    $region16: #{tpu_custom_call.1} parent=1 // pred_region
      %39 = dma.done [#allocation6], 512
    $region17: #{tpu_custom_call.1} parent=1 // pred_fallthru
      _
    %v40 = vld [vmem:[#allocation2] sm:$0xff]
    %v41 = vld [vmem:[#allocation2 + $0x8] sm:$0xff]
    %v42 = vld [vmem:[#allocation5] sm:$0xff]
    %v43 = vld [vmem:[#allocation5 + $0x8] sm:$0xff]
    %v44 = vld [vmem:[#allocation5 + $0x10] sm:$0xff]
    %v45 = vld [vmem:[#allocation5 + $0x18] sm:$0xff]
    %vm46 = vcmask 261120
    %v48 = vsel %vm46, %v40, 0
    %v51 = vsel %vm46, %v41, 0
    %53 = vmatprep.subr.mxu0 0.0
    %54 = vmatpush1.msra.mxu0 %v42
    %55 = vmatprep.subr.mxu0 0.0
    %56 = vmatpush1.msra.mxu0 %v43
    %57 = vmatprep.subr.mxu0 0.0
    %58 = vmatpush1.msra.mxu0 %v44
    %59 = vmatprep.subr.mxu0 0.0
    %60 = vmatpush1.msra.mxu0 %v45
    %61 = vmatprep.subr.mxu0 0.0
    %62 = vmatpush1.msra.mxu0 0.0
    %63 = vmatprep.subr.mxu0 0.0
    %64 = vmatpush1.msra.mxu0 0.0
    %65 = vmatprep.subr.mxu0 0.0
    %66 = vmatpush1.msra.mxu0 0.0
    %67 = vmatprep.subr.mxu0 0.0
    %68 = vmatpush1.msra.mxu0 0.0
    %69 = vmatprep.subr.mxu0 0.0
    %70 = vmatpush1.msra.mxu0 0.0
    %71 = vmatprep.subr.mxu0 0.0
    %72 = vmatpush1.msra.mxu0 0.0
    %73 = vmatprep.subr.mxu0 0.0
    %74 = vmatpush1.msra.mxu0 0.0
    %75 = vmatprep.subr.mxu0 0.0
    %76 = vmatpush1.msra.mxu0 0.0
    %77 = vmatprep.subr.mxu0 0.0
    %78 = vmatpush1.msra.mxu0 0.0
    %79 = vmatprep.subr.mxu0 0.0
    %80 = vmatpush1.msra.mxu0 0.0
    %81 = vmatprep.subr.mxu0 0.0
    %82 = vmatpush1.msra.mxu0 0.0
    %83 = vmatprep.subr.mxu0 0.0
    %84 = vmatpush1.msra.mxu0 0.0
    %85 = vmatprep.subr.mxu0 0.0
    %86 = vmatpush1.msra.mxu0 0.0
    %87 = vmatprep.subr.mxu0 0.0
    %88 = vmatpush1.msra.mxu0 0.0
    %89 = vmatprep.subr.mxu0 0.0
    %90 = vmatpush1.msra.mxu0 0.0
    %91 = vmatprep.subr.mxu0 0.0
    %92 = vmatpush1.msra.mxu0 0.0
    %93 = vmatprep.subr.mxu0 0.0
    %94 = vmatpush1.msra.mxu0 0.0
    %95 = vmatprep.subr.mxu0 0.0
    %96 = vmatpush1.msra.mxu0 0.0
    %97 = vmatprep.subr.mxu0 0.0
    %98 = vmatpush1.msra.mxu0 0.0
    %99 = vmatprep.subr.mxu0 0.0
    %100 = vmatpush1.msra.mxu0 0.0
    %101 = vmatprep.subr.mxu0 0.0
    %102 = vmatpush1.msra.mxu0 0.0
    %103 = vmatprep.subr.mxu0 0.0
    %104 = vmatpush1.msra.mxu0 0.0
    %105 = vmatprep.subr.mxu0 0.0
    %106 = vmatpush1.msra.mxu0 0.0
    %107 = vmatprep.subr.mxu0 0.0
    %108 = vmatpush1.msra.mxu0 0.0
    %109 = vmatprep.subr.mxu0 0.0
    %110 = vmatpush1.msra.mxu0 0.0
    %111 = vmatprep.subr.mxu0 0.0
    %112 = vmatpush1.msra.mxu0 0.0
    %113 = vmatprep.subr.mxu0 0.0
    %114 = vmatpush1.msra.mxu0 0.0
    %115 = vmatprep.subr.mxu0 0.0
    %116 = vmatpush1.msra.mxu0 0.0
    %117 = vmatprep.mubr.f32.mxu0 0.0
    %118 = vmatmul.mubr.f32.gmra.mrb[0].mxu0 %v48
    %v119 = vpop.f32.mrb[0].mxu0
    %v120 = vadd.f32 0.0, %v119
    %v121 = vpop.f32.mrb[0].mxu0
    %122 = vmatprep.mubr.f32.mxu0 0.0
    %123 = vmatmul.mubr.f32.gmra.mrb[0].mxu0 %v51
    %v124 = vpop.f32.mrb[0].mxu0
    %v125 = vadd.f32 0.0, %v124
    %v126 = vpop.f32.mrb[0].mxu0
    %127 = vdwg.mxu0
    %vm128 = vcmask 523264
    %129 = vst.msk [vmem:[#allocation7] sm:$0xff] %vm128, %v120
    %130 = vst.msk [vmem:[#allocation7 + $0x8] sm:$0xff] %vm128, %v125
    // Predicated region
    $region18: #{tpu_custom_call.1} parent=1 // pred_check
      _
    $region19: #{tpu_custom_call.1} parent=1 // pred_check_branch
      %132 = sbr.rel (0) target = $region21
    $region20: #{tpu_custom_call.1} parent=1 // pred_region
      %s134 = ssub.s32 256, 256
      %135 = vsyncadd [#allocation4], %s134
      %s136 = sshll.u32 [#allocation7], 4
      %s137 = int_to_ptr.vmem [resolvable:$true] %s136
      %142 = dma.vmem_to_hbm [thread:$0]  %s137, 256, %s2, [#allocation4], 128, 128, 8
    $region21: #{tpu_custom_call.1} parent=1 // pred_fallthru
      _
    // Predicated region
    $region22: #{tpu_custom_call.1} parent=1 // pred_check
      _
    $region23: #{tpu_custom_call.1} parent=1 // pred_check_branch
      %144 = sbr.rel (0) target = $region25
    $region24: #{tpu_custom_call.1} parent=1 // pred_region
      %145 = dma.done [#allocation4], 256
    $region25: #{tpu_custom_call.1} parent=1 // pred_fallthru
      _
    %146 = vsyncpa [#allocation3], 1
    %147 = vsyncpa [#allocation6], 1
    %148 = vsyncpa [#allocation4], 1

</llo_original>
